<compile_context>
chip_gen: v5e
topology: v5e:2x2
jax: 0.10.0
libtpu: 0.0.40
codegen_flags: <defaults>
</compile_context>

<pallas_src>
import functools
from typing import Any, NamedTuple, Tuple

import jax
import jax.numpy as jnp
from jax.experimental import pallas as pl
from jax.experimental.pallas import tpu as pltpu


def _round_up(x, m):
    return ((x + m - 1) // m) * m


def _apply_activation(y, act):
    if act == "tanh":
        return jnp.tanh(y)
    if act == "relu":
        return jnp.maximum(y, 0.0)
    if act == "leakyrelu":
        return jnp.where(y >= 0.0, y, 0.01 * y)  # PyTorch default slope 0.01
    if act == "sigmoid":
        return jax.nn.sigmoid(y)
    # 'identity' / 'none' -> no activation (matches PyTorch Layer semantics)
    return y


def _fused_mlp_kernel(*refs, activations, matmul_dtype):
    """refs = (x_ref, w0, b0, w1, b1, ..., o_ref). One batch tile per grid step."""
    x_ref = refs[0]
    o_ref = refs[-1]
    layer_refs = refs[1:-1]

    h = x_ref[...].astype(jnp.float32)
    for li, act in enumerate(activations):
        w_ref = layer_refs[2 * li]
        b_ref = layer_refs[2 * li + 1]
        # Weights are already stored in matmul_dtype (pre-cast at padding
        # time); only the (tm, width) activation tile is cast per step.
        y = jnp.dot(h.astype(matmul_dtype), w_ref[...],
                    preferred_element_type=jnp.float32)
        y = y + b_ref[...]              # (tm, OUT_pad) + (1, OUT_pad), f32
        h = _apply_activation(y, act)   # elementwise kept in f32 (v5e-safe)
        # TODO(synk): on v6e/v7x, casting h to bf16 here would halve the live
        # intermediate for very wide layers; skipped (no bf16 VPU on v5e).
    o_ref[...] = h.astype(o_ref.dtype)


class PreparedFNNParams(NamedTuple):
    sizes: Tuple[int, ...]   # logical widths (IN, h1, ..., OUT)
    pads: Tuple[int, ...]    # lane-padded widths (multiples of 128)
    flat: Tuple[Any, ...]    # (w0_p, b0_p, w1_p, b1_p, ...); weights in matmul_dtype
    matmul_dtype: Any


def prepare_fnn_params(params, matmul_dtype=jnp.bfloat16):
    """Zero-pad weights/biases to (8,128)-friendly tiles and pre-cast weights
    to `matmul_dtype`.  Call ONCE and reuse across forward calls (hoists the
    padding/casting HBM traffic out of the per-call path)."""
    sizes = [params[0][0].shape[0]] + [w.shape[1] for (w, _) in params]
    pads = [_round_up(s, 128) for s in sizes]
    flat = []
    for li, (w, b) in enumerate(params):
        pin, pout = pads[li], pads[li + 1]
        w_p = (jnp.zeros((pin, pout), jnp.float32)
               .at[: w.shape[0], : w.shape[1]].set(w.astype(jnp.float32))
               .astype(matmul_dtype))
        b_p = jnp.zeros((1, pout), jnp.float32).at[0, : b.shape[0]].set(
            b.astype(jnp.float32))
        flat += [w_p, b_p]
    return PreparedFNNParams(tuple(sizes), tuple(pads), tuple(flat), matmul_dtype)


# Whether this Mosaic build accepts pipeline_mode=pl.Buffered(1) on the
# constant-index weight BlockSpecs.  None = untested, then True/False.
_SINGLE_BUFFER_WEIGHTS_OK = None


def _make_pallas_call(*, depth, pads, tm, B_pad, acts, matmul_dtype, out_dtype,
                      single_buffer_weights):
    wmode = pl.Buffered(1) if single_buffer_weights else None

    in_specs = [pl.BlockSpec((tm, pads[0]), lambda i: (i, 0))]
    for li in range(depth):
        pin, pout = pads[li], pads[li + 1]
        # Weights/biases: same block every batch tile -> stay VMEM-resident;
        # single-buffered when supported (double-buffering them is waste).
        in_specs.append(pl.BlockSpec((pin, pout), lambda i: (0, 0),
                                     pipeline_mode=wmode))
        in_specs.append(pl.BlockSpec((1, pout), lambda i: (0, 0),
                                     pipeline_mode=wmode))

    # Explicit VMEM budget: resident weights/biases (x1 or x2 buffers),
    # double-buffered x/out batch tiles, plus slack for live f32 intermediates.
    wbytes = jnp.dtype(matmul_dtype).itemsize
    buf_mult = 1 if single_buffer_weights else 2
    resident = buf_mult * sum(pads[i] * pads[i + 1] * wbytes
                              + 8 * pads[i + 1] * 4 for i in range(depth))
    io = 2 * 4 * tm * (pads[0] + pads[-1])
    live = 4 * 4 * tm * max(pads)
    vmem_limit = int(min(128 * 2**20,
                         max(32 * 2**20, 1.5 * (resident + io + live))))

    # Scheduling hints for XLA.
    flops = 2 * B_pad * sum(pads[i] * pads[i + 1] for i in range(depth))
    trans = B_pad * sum(pads[i + 1] for i in range(depth)
                        if acts[i] in ("tanh", "sigmoid"))
    bytes_accessed = (4 * B_pad * (pads[0] + pads[-1])
                      + sum(pads[i] * pads[i + 1] * wbytes + 4 * pads[i + 1]
                            for i in range(depth)))

    return pl.pallas_call(
        functools.partial(_fused_mlp_kernel, activations=acts,
                          matmul_dtype=matmul_dtype),
        out_shape=jax.ShapeDtypeStruct((B_pad, pads[-1]), out_dtype),
        grid=(B_pad // tm,),
        in_specs=in_specs,
        out_specs=pl.BlockSpec((tm, pads[-1]), lambda i: (i, 0)),
        compiler_params=pltpu.CompilerParams(
            dimension_semantics=("parallel",),
            vmem_limit_bytes=vmem_limit,
        ),
        cost_estimate=pl.CostEstimate(flops=flops, transcendentals=trans,
                                      bytes_accessed=bytes_accessed),
    )


def fnn_forward(x, params, activation="tanh", *, block_b=512,
                matmul_dtype=jnp.bfloat16):
    """Fused FNN.forward.

    x: (B, IN) f32.
    params: list of (w_t (IN,OUT), b (OUT,)) or a PreparedFNNParams (preferred:
            call prepare_fnn_params once and reuse; its dtype then wins over
            the matmul_dtype kwarg).
    activation: string (hidden layers use it, last layer pure linear -- FNN
            semantics) or an explicit per-layer list.
    """
    if not isinstance(params, PreparedFNNParams):
        params = prepare_fnn_params(params, matmul_dtype=matmul_dtype)
    sizes, pads, flat, mm_dtype = params
    depth = len(sizes) - 1

    if isinstance(activation, (list, tuple)):
        if len(activation) != depth:
            raise ValueError("activation list length must equal layer depth")
        acts = tuple(activation)
    else:
        acts = tuple((depth - 1) * [activation] + ["none"])

    B, IN = x.shape
    assert IN == sizes[0], "input width does not match params"
    B_pad = _round_up(B, 8)                  # sublane-pad batch
    tm = min(B_pad, block_b)                 # biggest batch tile that fits
    B_pad = _round_up(B_pad, tm)
    # TODO(synk): for v7x small-batch (single grid step) the second TensorCore
    # idles; splitting the widest layer's OUT dim onto a second parallel axis
    # needs a per-layer restructure and is not done here.

    x_p = jnp.zeros((B_pad, pads[0]), x.dtype).at[:B, :IN].set(x)

    global _SINGLE_BUFFER_WEIGHTS_OK
    out_p = None
    if _SINGLE_BUFFER_WEIGHTS_OK is not False:
        try:
            call = _make_pallas_call(
                depth=depth, pads=pads, tm=tm, B_pad=B_pad, acts=acts,
                matmul_dtype=mm_dtype, out_dtype=x.dtype,
                single_buffer_weights=True)
            out_p = call(x_p, *flat)
            _SINGLE_BUFFER_WEIGHTS_OK = True
        except Exception:
            _SINGLE_BUFFER_WEIGHTS_OK = False
            out_p = None
    if out_p is None:
        call = _make_pallas_call(
            depth=depth, pads=pads, tm=tm, B_pad=B_pad, acts=acts,
            matmul_dtype=mm_dtype, out_dtype=x.dtype,
            single_buffer_weights=False)
        out_p = call(x_p, *flat)

    return out_p[:B, : sizes[-1]]


def init_fnn_params(key, layer_sizes, initialize="zero"):
    """Replicates FNN.__init__ parameter setup deterministically.

    Hidden layers: xavier_normal_ weights, zero bias ('none' init).
    Last layer: per `initialize` ('zero' default -> zero weights/bias).
    Weights are returned already transposed to (in, out)."""
    depth = len(layer_sizes) - 1
    init_list = (depth - 1) * ["none"] + [initialize]
    params = []
    for i in range(depth):
        fan_in, fan_out = layer_sizes[i], layer_sizes[i + 1]
        key, sub = jax.random.split(key)
        if init_list[i] == "zero":
            w_t = jnp.zeros((fan_in, fan_out), jnp.float32)
        else:
            std = (2.0 / (fan_in + fan_out)) ** 0.5  # xavier_normal_, gain=1
            w_t = std * jax.random.normal(sub, (fan_in, fan_out), jnp.float32)
        b = jnp.zeros((fan_out,), jnp.float32)
        params.append((w_t, b))
    return params


def fnn_forward_ref(x, params, activation="tanh"):
    """Pure-JAX f32 reference (all activation branches)."""
    depth = len(params)
    act_list = (depth - 1) * [activation] + ["none"]
    h = x
    for (w_t, b), act in zip(params, act_list):
        h = _apply_activation(h @ w_t + b, act)
    return h


if __name__ == "__main__":
    key = jax.random.PRNGKey(0)
    layer_sizes = [16, 32, 32, 8]
    batch = 8

    k_x, k_p = jax.random.split(key)
    x = jax.random.normal(k_x, (batch, layer_sizes[0]), jnp.float32)

    # Default FNN(..., activation='tanh', initialize='zero'): last layer weights
    # zero-initialized, hidden layers xavier_normal_.  f32 MXU path -> tight tol.
    params = init_fnn_params(k_p, layer_sizes, initialize="zero")
    prepped_f32 = prepare_fnn_params(params, matmul_dtype=jnp.float32)
    out = jax.block_until_ready(fnn_forward(x, prepped_f32, activation="tanh"))
    ref = fnn_forward_ref(x, params, activation="tanh")
    assert out.shape == (batch, layer_sizes[-1])
    assert jnp.allclose(out, ref, atol=1e-5, rtol=1e-5)

    # Non-trivial final-layer weights: exercise the full matmul chain (f32).
    params_nz = init_fnn_params(k_p, layer_sizes, initialize="none")
    prepped_nz_f32 = prepare_fnn_params(params_nz, matmul_dtype=jnp.float32)
    out_nz = jax.block_until_ready(fnn_forward(x, prepped_nz_f32))
    ref_nz = fnn_forward_ref(x, params_nz)
    assert jnp.allclose(out_nz, ref_nz, atol=1e-5, rtol=1e-5)

    # Default bf16 MXU path (weights pre-cast once) -- looser tolerance.
    prepped_nz_bf16 = prepare_fnn_params(params_nz, matmul_dtype=jnp.bfloat16)
    out_bf = jax.block_until_ready(fnn_forward(x, prepped_nz_bf16))
    assert out_bf.shape == ref_nz.shape
    assert jnp.allclose(out_bf, ref_nz, atol=5e-2, rtol=5e-2)

    # Other activation branches (f32 path, tight tolerance).
    for act in ("relu", "leakyrelu", "sigmoid", "identity"):
        out_a = jax.block_until_ready(
            fnn_forward(x, prepped_nz_f32, activation=act))
        ref_a = fnn_forward_ref(x, params_nz, activation=act)
        assert jnp.allclose(out_a, ref_a, atol=1e-5, rtol=1e-5), act

    # Odd batch size (tests batch padding / output slicing).
    x_odd = jax.random.normal(k_x, (5, layer_sizes[0]), jnp.float32)
    out_odd = jax.block_until_ready(fnn_forward(x_odd, prepped_nz_f32))
    assert jnp.allclose(out_odd, fnn_forward_ref(x_odd, params_nz),
                        atol=1e-5, rtol=1e-5)

    print("KERNEL_OK")
</pallas_src>

<mosaic_0001>
module attributes {stable_mosaic.version = 11 : i64} {
  func.func @_fused_mlp_kernel(%arg0: i32, %arg1: memref<8x128xf32, #tpu.memory_space<vmem>>, %arg2: memref<128x128xf32, #tpu.memory_space<vmem>>, %arg3: memref<1x128xf32, #tpu.memory_space<vmem>>, %arg4: memref<128x128xf32, #tpu.memory_space<vmem>>, %arg5: memref<1x128xf32, #tpu.memory_space<vmem>>, %arg6: memref<128x128xf32, #tpu.memory_space<vmem>>, %arg7: memref<1x128xf32, #tpu.memory_space<vmem>>, %arg8: memref<8x128xf32, #tpu.memory_space<vmem>>) attributes {dimension_semantics = [#tpu.dimension_semantics<parallel>], iteration_bounds = array<i64: 1>, scalar_prefetch = 0 : i64, scratch_operands = 0 : i64, tpu.core_type = #tpu.core_type<tc>, window_params = [{transform_indices = @transform_0, window_bounds = array<i64: 8, 128>}, {pipeline_mode = #tpu.pipeline_mode<synchronous>, transform_indices = @transform_1, window_bounds = array<i64: 128, 128>}, {pipeline_mode = #tpu.pipeline_mode<synchronous>, transform_indices = @transform_2, window_bounds = array<i64: 1, 128>}, {pipeline_mode = #tpu.pipeline_mode<synchronous>, transform_indices = @transform_3, window_bounds = array<i64: 128, 128>}, {pipeline_mode = #tpu.pipeline_mode<synchronous>, transform_indices = @transform_4, window_bounds = array<i64: 1, 128>}, {pipeline_mode = #tpu.pipeline_mode<synchronous>, transform_indices = @transform_5, window_bounds = array<i64: 128, 128>}, {pipeline_mode = #tpu.pipeline_mode<synchronous>, transform_indices = @transform_6, window_bounds = array<i64: 1, 128>}, {transform_indices = @transform_7, window_bounds = array<i64: 8, 128>}]} {
    %c0 = arith.constant 0 : index
    %c0_0 = arith.constant 0 : index
    %0 = vector.load %arg1[%c0, %c0_0] : memref<8x128xf32, #tpu.memory_space<vmem>>, vector<8x128xf32>
    %c0_1 = arith.constant 0 : index
    %c0_2 = arith.constant 0 : index
    %1 = vector.load %arg2[%c0_1, %c0_2] : memref<128x128xf32, #tpu.memory_space<vmem>>, vector<128x128xf32>
    %cst = arith.constant dense<0.000000e+00> : vector<8x128xf32>
    %2 = tpu.matmul %0, %1, %cst {dimension_numbers = #tpu.dot_dimension_numbers<[1], [0], [0], [1], [0, 0, 1, 1], [], []>} : vector<8x128xf32>, vector<128x128xf32>, vector<8x128xf32> -> vector<8x128xf32>
    %c0_3 = arith.constant 0 : index
    %c0_4 = arith.constant 0 : index
    %3 = vector.load %arg3[%c0_3, %c0_4] : memref<1x128xf32, #tpu.memory_space<vmem>>, vector<1x128xf32>
    %4 = vector.broadcast %3 : vector<1x128xf32> to vector<8x128xf32>
    %5 = arith.addf %2, %4 : vector<8x128xf32>
    %6 = math.tanh %5 : vector<8x128xf32>
    %c0_5 = arith.constant 0 : index
    %c0_6 = arith.constant 0 : index
    %7 = vector.load %arg4[%c0_5, %c0_6] : memref<128x128xf32, #tpu.memory_space<vmem>>, vector<128x128xf32>
    %cst_7 = arith.constant dense<0.000000e+00> : vector<8x128xf32>
    %8 = tpu.matmul %6, %7, %cst_7 {dimension_numbers = #tpu.dot_dimension_numbers<[1], [0], [0], [1], [0, 0, 1, 1], [], []>} : vector<8x128xf32>, vector<128x128xf32>, vector<8x128xf32> -> vector<8x128xf32>
    %c0_8 = arith.constant 0 : index
    %c0_9 = arith.constant 0 : index
    %9 = vector.load %arg5[%c0_8, %c0_9] : memref<1x128xf32, #tpu.memory_space<vmem>>, vector<1x128xf32>
    %10 = vector.broadcast %9 : vector<1x128xf32> to vector<8x128xf32>
    %11 = arith.addf %8, %10 : vector<8x128xf32>
    %12 = math.tanh %11 : vector<8x128xf32>
    %c0_10 = arith.constant 0 : index
    %c0_11 = arith.constant 0 : index
    %13 = vector.load %arg6[%c0_10, %c0_11] : memref<128x128xf32, #tpu.memory_space<vmem>>, vector<128x128xf32>
    %cst_12 = arith.constant dense<0.000000e+00> : vector<8x128xf32>
    %14 = tpu.matmul %12, %13, %cst_12 {dimension_numbers = #tpu.dot_dimension_numbers<[1], [0], [0], [1], [0, 0, 1, 1], [], []>} : vector<8x128xf32>, vector<128x128xf32>, vector<8x128xf32> -> vector<8x128xf32>
    %c0_13 = arith.constant 0 : index
    %c0_14 = arith.constant 0 : index
    %15 = vector.load %arg7[%c0_13, %c0_14] : memref<1x128xf32, #tpu.memory_space<vmem>>, vector<1x128xf32>
    %16 = vector.broadcast %15 : vector<1x128xf32> to vector<8x128xf32>
    %17 = arith.addf %14, %16 : vector<8x128xf32>
    %c0_15 = arith.constant 0 : index
    %c0_16 = arith.constant 0 : index
    %18 = vector.load %arg8[%c0_15, %c0_16] : memref<8x128xf32, #tpu.memory_space<vmem>>, vector<8x128xf32>
    tpu.vector_store %arg8[%c0_15, %c0_16], %17 {strides = array<i32>} : memref<8x128xf32, #tpu.memory_space<vmem>>, vector<8x128xf32>,
    return
  }
  func.func @transform_0(%arg0: i32) -> (i32, i32) {
    %c0_i32 = arith.constant 0 : i32
    %c0_i32_0 = arith.constant 0 : i32
    return %arg0, %c0_i32 : i32, i32
  }
  func.func @transform_1(%arg0: i32) -> (i32, i32) {
    %c0_i32 = arith.constant 0 : i32
    %c0_i32_0 = arith.constant 0 : i32
    %c0_i32_1 = arith.constant 0 : i32
    return %c0_i32, %c0_i32_0 : i32, i32
  }
  func.func @transform_2(%arg0: i32) -> (i32, i32) {
    %c0_i32 = arith.constant 0 : i32
    %c0_i32_0 = arith.constant 0 : i32
    %c0_i32_1 = arith.constant 0 : i32
    return %c0_i32, %c0_i32_0 : i32, i32
  }
  func.func @transform_3(%arg0: i32) -> (i32, i32) {
    %c0_i32 = arith.constant 0 : i32
    %c0_i32_0 = arith.constant 0 : i32
    %c0_i32_1 = arith.constant 0 : i32
    return %c0_i32, %c0_i32_0 : i32, i32
  }
  func.func @transform_4(%arg0: i32) -> (i32, i32) {
    %c0_i32 = arith.constant 0 : i32
    %c0_i32_0 = arith.constant 0 : i32
    %c0_i32_1 = arith.constant 0 : i32
    return %c0_i32, %c0_i32_0 : i32, i32
  }
  func.func @transform_5(%arg0: i32) -> (i32, i32) {
    %c0_i32 = arith.constant 0 : i32
    %c0_i32_0 = arith.constant 0 : i32
    %c0_i32_1 = arith.constant 0 : i32
    return %c0_i32, %c0_i32_0 : i32, i32
  }
  func.func @transform_6(%arg0: i32) -> (i32, i32) {
    %c0_i32 = arith.constant 0 : i32
    %c0_i32_0 = arith.constant 0 : i32
    %c0_i32_1 = arith.constant 0 : i32
    return %c0_i32, %c0_i32_0 : i32, i32
  }
  func.func @transform_7(%arg0: i32) -> (i32, i32) {
    %c0_i32 = arith.constant 0 : i32
    %c0_i32_0 = arith.constant 0 : i32
    return %arg0, %c0_i32 : i32, i32
  }
}

module attributes {stable_mosaic.version = 11 : i64} {
  func.func @_fused_mlp_kernel(%arg0: i32, %arg1: memref<8x128xf32, #tpu.memory_space<vmem>>, %arg2: memref<128x128xf32, #tpu.memory_space<vmem>>, %arg3: memref<1x128xf32, #tpu.memory_space<vmem>>, %arg4: memref<128x128xf32, #tpu.memory_space<vmem>>, %arg5: memref<1x128xf32, #tpu.memory_space<vmem>>, %arg6: memref<128x128xf32, #tpu.memory_space<vmem>>, %arg7: memref<1x128xf32, #tpu.memory_space<vmem>>, %arg8: memref<8x128xf32, #tpu.memory_space<vmem>>) attributes {dimension_semantics = [#tpu.dimension_semantics<parallel>], iteration_bounds = array<i64: 1>, scalar_prefetch = 0 : i64, scratch_operands = 0 : i64, tpu.core_type = #tpu.core_type<tc>, window_params = [{transform_indices = @transform_0, window_bounds = array<i64: 8, 128>}, {pipeline_mode = #tpu.pipeline_mode<synchronous>, transform_indices = @transform_1, window_bounds = array<i64: 128, 128>}, {pipeline_mode = #tpu.pipeline_mode<synchronous>, transform_indices = @transform_2, window_bounds = array<i64: 1, 128>}, {pipeline_mode = #tpu.pipeline_mode<synchronous>, transform_indices = @transform_3, window_bounds = array<i64: 128, 128>}, {pipeline_mode = #tpu.pipeline_mode<synchronous>, transform_indices = @transform_4, window_bounds = array<i64: 1, 128>}, {pipeline_mode = #tpu.pipeline_mode<synchronous>, transform_indices = @transform_5, window_bounds = array<i64: 128, 128>}, {pipeline_mode = #tpu.pipeline_mode<synchronous>, transform_indices = @transform_6, window_bounds = array<i64: 1, 128>}, {transform_indices = @transform_7, window_bounds = array<i64: 8, 128>}]} {
    %c0 = arith.constant 0 : index
    %c0_0 = arith.constant 0 : index
    %0 = vector.load %arg1[%c0, %c0_0] : memref<8x128xf32, #tpu.memory_space<vmem>>, vector<8x128xf32>
    %c0_1 = arith.constant 0 : index
    %c0_2 = arith.constant 0 : index
    %1 = vector.load %arg2[%c0_1, %c0_2] : memref<128x128xf32, #tpu.memory_space<vmem>>, vector<128x128xf32>
    %cst = arith.constant dense<0.000000e+00> : vector<8x128xf32>
    %2 = tpu.matmul %0, %1, %cst {dimension_numbers = #tpu.dot_dimension_numbers<[1], [0], [0], [1], [0, 0, 1, 1], [], []>} : vector<8x128xf32>, vector<128x128xf32>, vector<8x128xf32> -> vector<8x128xf32>
    %c0_3 = arith.constant 0 : index
    %c0_4 = arith.constant 0 : index
    %3 = vector.load %arg3[%c0_3, %c0_4] : memref<1x128xf32, #tpu.memory_space<vmem>>, vector<1x128xf32>
    %4 = vector.broadcast %3 : vector<1x128xf32> to vector<8x128xf32>
    %5 = arith.addf %2, %4 : vector<8x128xf32>
    %6 = math.tanh %5 : vector<8x128xf32>
    %c0_5 = arith.constant 0 : index
    %c0_6 = arith.constant 0 : index
    %7 = vector.load %arg4[%c0_5, %c0_6] : memref<128x128xf32, #tpu.memory_space<vmem>>, vector<128x128xf32>
    %cst_7 = arith.constant dense<0.000000e+00> : vector<8x128xf32>
    %8 = tpu.matmul %6, %7, %cst_7 {dimension_numbers = #tpu.dot_dimension_numbers<[1], [0], [0], [1], [0, 0, 1, 1], [], []>} : vector<8x128xf32>, vector<128x128xf32>, vector<8x128xf32> -> vector<8x128xf32>
    %c0_8 = arith.constant 0 : index
    %c0_9 = arith.constant 0 : index
    %9 = vector.load %arg5[%c0_8, %c0_9] : memref<1x128xf32, #tpu.memory_space<vmem>>, vector<1x128xf32>
    %10 = vector.broadcast %9 : vector<1x128xf32> to vector<8x128xf32>
    %11 = arith.addf %8, %10 : vector<8x128xf32>
    %12 = math.tanh %11 : vector<8x128xf32>
    %c0_10 = arith.constant 0 : index
    %c0_11 = arith.constant 0 : index
    %13 = vector.load %arg6[%c0_10, %c0_11] : memref<128x128xf32, #tpu.memory_space<vmem>>, vector<128x128xf32>
    %cst_12 = arith.constant dense<0.000000e+00> : vector<8x128xf32>
    %14 = tpu.matmul %12, %13, %cst_12 {dimension_numbers = #tpu.dot_dimension_numbers<[1], [0], [0], [1], [0, 0, 1, 1], [], []>} : vector<8x128xf32>, vector<128x128xf32>, vector<8x128xf32> -> vector<8x128xf32>
    %c0_13 = arith.constant 0 : index
    %c0_14 = arith.constant 0 : index
    %15 = vector.load %arg7[%c0_13, %c0_14] : memref<1x128xf32, #tpu.memory_space<vmem>>, vector<1x128xf32>
    %16 = vector.broadcast %15 : vector<1x128xf32> to vector<8x128xf32>
    %17 = arith.addf %14, %16 : vector<8x128xf32>
    %c0_15 = arith.constant 0 : index
    %c0_16 = arith.constant 0 : index
    %18 = vector.load %arg8[%c0_15, %c0_16] : memref<8x128xf32, #tpu.memory_space<vmem>>, vector<8x128xf32>
    tpu.vector_store %arg8[%c0_15, %c0_16], %17 {strides = array<i32>} : memref<8x128xf32, #tpu.memory_space<vmem>>, vector<8x128xf32>,
    return
  }
  func.func @transform_0(%arg0: i32) -> (i32, i32) {
    %c0_i32 = arith.constant 0 : i32
    %c0_i32_0 = arith.constant 0 : i32
    return %arg0, %c0_i32 : i32, i32
  }
  func.func @transform_1(%arg0: i32) -> (i32, i32) {
    %c0_i32 = arith.constant 0 : i32
    %c0_i32_0 = arith.constant 0 : i32
    %c0_i32_1 = arith.constant 0 : i32
    return %c0_i32, %c0_i32_0 : i32, i32
  }
  func.func @transform_2(%arg0: i32) -> (i32, i32) {
    %c0_i32 = arith.constant 0 : i32
    %c0_i32_0 = arith.constant 0 : i32
    %c0_i32_1 = arith.constant 0 : i32
    return %c0_i32, %c0_i32_0 : i32, i32
  }
  func.func @transform_3(%arg0: i32) -> (i32, i32) {
    %c0_i32 = arith.constant 0 : i32
    %c0_i32_0 = arith.constant 0 : i32
    %c0_i32_1 = arith.constant 0 : i32
    return %c0_i32, %c0_i32_0 : i32, i32
  }
  func.func @transform_4(%arg0: i32) -> (i32, i32) {
    %c0_i32 = arith.constant 0 : i32
    %c0_i32_0 = arith.constant 0 : i32
    %c0_i32_1 = arith.constant 0 : i32
    return %c0_i32, %c0_i32_0 : i32, i32
  }
  func.func @transform_5(%arg0: i32) -> (i32, i32) {
    %c0_i32 = arith.constant 0 : i32
    %c0_i32_0 = arith.constant 0 : i32
    %c0_i32_1 = arith.constant 0 : i32
    return %c0_i32, %c0_i32_0 : i32, i32
  }
  func.func @transform_6(%arg0: i32) -> (i32, i32) {
    %c0_i32 = arith.constant 0 : i32
    %c0_i32_0 = arith.constant 0 : i32
    %c0_i32_1 = arith.constant 0 : i32
    return %c0_i32, %c0_i32_0 : i32, i32
  }
  func.func @transform_7(%arg0: i32) -> (i32, i32) {
    %c0_i32 = arith.constant 0 : i32
    %c0_i32_0 = arith.constant 0 : i32
    return %arg0, %c0_i32 : i32, i32
  }
}

</mosaic_0001>

<llo_original>
// kernel: tpu_custom_call.1
$region0: #{tpu_custom_call.1}
  #allocation0 [shape = 'u32[]', space=smem, size = 0x4, offset = 0x4, fixed_abs, tag = 'smem constant byte address 0x4 - core index']
  #allocation1 [shape = 'u32[72,128]{1,0:T(1,128)}', space=vmem, size = 0x9000, scoped, tag = 'internal scratch']
  %s0 = inlined_call_operand.hbm [shape: f32[8,128], index: 0, kind: input, shape index: {}]
  %s1 = inlined_call_operand.hbm [shape: f32[128,128], index: 1, kind: input, shape index: {}]
  %s2 = inlined_call_operand.vmem [shape: f32[1,128], index: 2, kind: input, shape index: {}]
  %s3 = inlined_call_operand.hbm [shape: f32[128,128], index: 3, kind: input, shape index: {}]
  %s4 = inlined_call_operand.vmem [shape: f32[1,128], index: 4, kind: input, shape index: {}]
  %s5 = inlined_call_operand.hbm [shape: f32[128,128], index: 5, kind: input, shape index: {}]
  %s6 = inlined_call_operand.vmem [shape: f32[1,128], index: 6, kind: input, shape index: {}]
  %s7 = inlined_call_operand.hbm [shape: f32[8,128], index: 7, kind: output, shape index: {}]
  %s8 = sld [smem:[#allocation0]]
  $region54: #{tpu_custom_call.1} parent=0
    _
  %s10 = ssub.s32 1, %s8
  %s11 = scalar_select 0, %s10, %s8
  $region1: #{tpu_custom_call.1} parent=0
    #allocation2 [shape = 'u8[4096]{0}', space=vmem, size = 0x1000, scoped, tag = 'input window, operand 0, single buffered']
    #allocation3 [shape = 's32[1]{0}', space=sflag, size = 0x4, scoped, tag = 'scoped memory for tpu_custom_call.1']
    #allocation4 [shape = 's32[1]{0}', space=sflag, size = 0x4, scoped, tag = 'scoped memory for tpu_custom_call.1']
    #allocation5 [shape = 'u8[65536]{0}', space=vmem, size = 0x10000, scoped, tag = 'input window, operand 1, single buffered']
    #allocation6 [shape = 's32[1]{0}', space=sflag, size = 0x4, scoped, tag = 'scoped memory for tpu_custom_call.1']
    #allocation7 [shape = 'u8[65536]{0}', space=vmem, size = 0x10000, scoped, tag = 'input window, operand 3, single buffered']
    #allocation8 [shape = 'u8[65536]{0}', space=vmem, size = 0x10000, scoped, tag = 'input window, operand 5, single buffered']
    #allocation9 [shape = 's32[1]{0}', space=sflag, size = 0x4, scoped, tag = 'scoped memory for tpu_custom_call.1']
    #allocation10 [shape = 'u8[4096]{0}', space=vmem, size = 0x1000, scoped, tag = 'output window, operand 0, single buffered']
    %12 = vsyncpa [#allocation3], 0
    %13 = vsyncpa [#allocation6], 0
    %14 = vsyncpa [#allocation9], 0
    %15 = vsyncpa [#allocation4], 0
    // Predicated region
    $region2: #{tpu_custom_call.1} parent=1 // pred_check
      _
    $region3: #{tpu_custom_call.1} parent=1 // pred_check_branch
      %17 = sbr.rel (0) target = $region5
    $region4: #{tpu_custom_call.1} parent=1 // pred_region
      %19 = vsyncadd [#allocation3], 0
      %s21 = sshll.u32 %s0, 4
      %s22 = int_to_ptr.hbm [resolvable:$true] %s21
      %s23 = sshll.u32 [#allocation2], 4
      %s24 = int_to_ptr.vmem [resolvable:$true] %s23
      %26 = dma.hbm_to_vmem [thread:$0]  %s22, 128, %s24, [#allocation3]
    $region5: #{tpu_custom_call.1} parent=1 // pred_fallthru
      _
    // Predicated region
    $region6: #{tpu_custom_call.1} parent=1 // pred_check
      _
    $region7: #{tpu_custom_call.1} parent=1 // pred_check_branch
      %28 = sbr.rel (0) target = $region9
    $region8: #{tpu_custom_call.1} parent=1 // pred_region
      %30 = vsyncadd [#allocation6], 0
      %s31 = sshll.u32 %s1, 4
      %s32 = int_to_ptr.hbm [resolvable:$true] %s31
      %s33 = sshll.u32 [#allocation5], 4
      %s34 = int_to_ptr.vmem [resolvable:$true] %s33
      %39 = dma.hbm_to_vmem [thread:$0]  %s32, 2048, %s34, [#allocation6], 128, 128, 8
    $region9: #{tpu_custom_call.1} parent=1 // pred_fallthru
      _
    // Predicated region
    $region10: #{tpu_custom_call.1} parent=1 // pred_check
      _
    $region11: #{tpu_custom_call.1} parent=1 // pred_check_branch
      %41 = sbr.rel (0) target = $region13
    $region12: #{tpu_custom_call.1} parent=1 // pred_region
      _
    $region13: #{tpu_custom_call.1} parent=1 // pred_fallthru
      _
    // Predicated region
    $region14: #{tpu_custom_call.1} parent=1 // pred_check
      _
    $region15: #{tpu_custom_call.1} parent=1 // pred_check_branch
      %43 = sbr.rel (0) target = $region17
    $region16: #{tpu_custom_call.1} parent=1 // pred_region
      %45 = vsyncadd [#allocation6], 0
      %s46 = sshll.u32 %s3, 4
      %s47 = int_to_ptr.hbm [resolvable:$true] %s46
      %s48 = sshll.u32 [#allocation7], 4
      %s49 = int_to_ptr.vmem [resolvable:$true] %s48
      %54 = dma.hbm_to_vmem [thread:$0]  %s47, 2048, %s49, [#allocation6], 128, 128, 8
    $region17: #{tpu_custom_call.1} parent=1 // pred_fallthru
      _
    // Predicated region
    $region18: #{tpu_custom_call.1} parent=1 // pred_check
      _
    $region19: #{tpu_custom_call.1} parent=1 // pred_check_branch
      %56 = sbr.rel (0) target = $region21
    $region20: #{tpu_custom_call.1} parent=1 // pred_region
      _
    $region21: #{tpu_custom_call.1} parent=1 // pred_fallthru
      _
    // Predicated region
    $region22: #{tpu_custom_call.1} parent=1 // pred_check
      _
    $region23: #{tpu_custom_call.1} parent=1 // pred_check_branch
      %58 = sbr.rel (0) target = $region25
    $region24: #{tpu_custom_call.1} parent=1 // pred_region
      %60 = vsyncadd [#allocation9], 0
      %s61 = sshll.u32 %s5, 4
      %s62 = int_to_ptr.hbm [resolvable:$true] %s61
      %s63 = sshll.u32 [#allocation8], 4
      %s64 = int_to_ptr.vmem [resolvable:$true] %s63
      %69 = dma.hbm_to_vmem [thread:$0]  %s62, 2048, %s64, [#allocation9], 128, 128, 8
    $region25: #{tpu_custom_call.1} parent=1 // pred_fallthru
      _
    // Predicated region
    $region26: #{tpu_custom_call.1} parent=1 // pred_check
      _
    $region27: #{tpu_custom_call.1} parent=1 // pred_check_branch
      %71 = sbr.rel (0) target = $region29
    $region28: #{tpu_custom_call.1} parent=1 // pred_region
      _
    $region29: #{tpu_custom_call.1} parent=1 // pred_fallthru
      _
    // Predicated region
    $region30: #{tpu_custom_call.1} parent=1 // pred_check
      _
    $region31: #{tpu_custom_call.1} parent=1 // pred_check_branch
      %73 = sbr.rel (0) target = $region33
    $region32: #{tpu_custom_call.1} parent=1 // pred_region
      %75 = dma.done [#allocation3], 128
    $region33: #{tpu_custom_call.1} parent=1 // pred_fallthru
      _
    // Predicated region
    $region34: #{tpu_custom_call.1} parent=1 // pred_check
      _
    $region35: #{tpu_custom_call.1} parent=1 // pred_check_branch
      %77 = sbr.rel (0) target = $region37
    $region36: #{tpu_custom_call.1} parent=1 // pred_region
      %79 = dma.done [#allocation6], 2048
    $region37: #{tpu_custom_call.1} parent=1 // pred_fallthru
      _
    // Predicated region
    $region38: #{tpu_custom_call.1} parent=1 // pred_check
      _
    $region39: #{tpu_custom_call.1} parent=1 // pred_check_branch
      %81 = sbr.rel (0) target = $region41
    $region40: #{tpu_custom_call.1} parent=1 // pred_region
      %83 = dma.done [#allocation6], 2048
    $region41: #{tpu_custom_call.1} parent=1 // pred_fallthru
      _
    // Predicated region
    $region42: #{tpu_custom_call.1} parent=1 // pred_check
      _
    $region43: #{tpu_custom_call.1} parent=1 // pred_check_branch
      %85 = sbr.rel (0) target = $region45
    $region44: #{tpu_custom_call.1} parent=1 // pred_region
      %87 = dma.done [#allocation9], 2048
    $region45: #{tpu_custom_call.1} parent=1 // pred_fallthru
      _
    %v88 = vld [vmem:[#allocation2] sm:$0xff]
    %v89 = vld [vmem:[#allocation5] sm:$0xff]
    %v90 = vld [vmem:[#allocation5 + $0x8] sm:$0xff]
    %v91 = vld [vmem:[#allocation5 + $0x10] sm:$0xff]
    %v92 = vld [vmem:[#allocation5 + $0x18] sm:$0xff]
    %v93 = vld [vmem:[#allocation5 + $0x20] sm:$0xff]
    %v94 = vld [vmem:[#allocation5 + $0x28] sm:$0xff]
    %v95 = vld [vmem:[#allocation5 + $0x30] sm:$0xff]
    %v96 = vld [vmem:[#allocation5 + $0x38] sm:$0xff]
    %v97 = vld [vmem:[#allocation5 + $0x40] sm:$0xff]
    %v98 = vld [vmem:[#allocation5 + $0x48] sm:$0xff]
    %v99 = vld [vmem:[#allocation5 + $0x50] sm:$0xff]
    %v100 = vld [vmem:[#allocation5 + $0x58] sm:$0xff]
    %v101 = vld [vmem:[#allocation5 + $0x60] sm:$0xff]
    %v102 = vld [vmem:[#allocation5 + $0x68] sm:$0xff]
    %v103 = vld [vmem:[#allocation5 + $0x70] sm:$0xff]
    %v104 = vld [vmem:[#allocation5 + $0x78] sm:$0xff]
    %v105 = vld [vmem:[%s2] sm:$0x1]
    %v107 = vperm.slane %v105, 0
    %109 = vmatpush.msra.mxu0 %v104
    %110 = vmatpush.msra.mxu0 %v103
    %111 = vmatpush.msra.mxu0 %v102
    %112 = vmatpush.msra.mxu0 %v101
    %113 = vmatpush.msra.mxu0 %v100
    %114 = vmatpush.msra.mxu0 %v99
    %115 = vmatpush.msra.mxu0 %v98
    %116 = vmatpush.msra.mxu0 %v97
    %117 = vmatpush.msra.mxu0 %v96
    %118 = vmatpush.msra.mxu0 %v95
    %119 = vmatpush.msra.mxu0 %v94
    %120 = vmatpush.msra.mxu0 %v93
    %121 = vmatpush.msra.mxu0 %v92
    %122 = vmatpush.msra.mxu0 %v91
    %123 = vmatpush.msra.mxu0 %v90
    %124 = vmatpush.msra.mxu0 %v89
    %125 = vmatmul.f32.gmra.mxu0 %v88
    %v126 = vpop.f32.mrf.mxu0
    %v127 = vadd.f32 %v107, %v126
    %128 = vdwg.mxu0
    %v129 = vtanh.pop %v127
    %v130 = vld [vmem:[#allocation7] sm:$0xff]
    %v131 = vld [vmem:[#allocation7 + $0x8] sm:$0xff]
    %v132 = vld [vmem:[#allocation7 + $0x10] sm:$0xff]
    %v133 = vld [vmem:[#allocation7 + $0x18] sm:$0xff]
    %v134 = vld [vmem:[#allocation7 + $0x20] sm:$0xff]
    %v135 = vld [vmem:[#allocation7 + $0x28] sm:$0xff]
    %v136 = vld [vmem:[#allocation7 + $0x30] sm:$0xff]
    %v137 = vld [vmem:[#allocation7 + $0x38] sm:$0xff]
    %v138 = vld [vmem:[#allocation7 + $0x40] sm:$0xff]
    %v139 = vld [vmem:[#allocation7 + $0x48] sm:$0xff]
    %v140 = vld [vmem:[#allocation7 + $0x50] sm:$0xff]
    %v141 = vld [vmem:[#allocation7 + $0x58] sm:$0xff]
    %v142 = vld [vmem:[#allocation7 + $0x60] sm:$0xff]
    %v143 = vld [vmem:[#allocation7 + $0x68] sm:$0xff]
    %v144 = vld [vmem:[#allocation7 + $0x70] sm:$0xff]
    %v145 = vld [vmem:[#allocation7 + $0x78] sm:$0xff]
    %v146 = vld [vmem:[%s4] sm:$0x1]
    %v148 = vperm.slane %v146, 0
    %150 = vmatpush.msra.mxu0 %v145
    %151 = vmatpush.msra.mxu0 %v144
    %152 = vmatpush.msra.mxu0 %v143
    %153 = vmatpush.msra.mxu0 %v142
    %154 = vmatpush.msra.mxu0 %v141
    %155 = vmatpush.msra.mxu0 %v140
    %156 = vmatpush.msra.mxu0 %v139
    %157 = vmatpush.msra.mxu0 %v138
    %158 = vmatpush.msra.mxu0 %v137
    %159 = vmatpush.msra.mxu0 %v136
    %160 = vmatpush.msra.mxu0 %v135
    %161 = vmatpush.msra.mxu0 %v134
    %162 = vmatpush.msra.mxu0 %v133
    %163 = vmatpush.msra.mxu0 %v132
    %164 = vmatpush.msra.mxu0 %v131
    %165 = vmatpush.msra.mxu0 %v130
    %166 = vmatmul.f32.gmra.mxu0 %v129
    %v167 = vpop.f32.mrf.mxu0
    %v168 = vadd.f32 %v148, %v167
    %169 = vdwg.mxu0
    %v170 = vtanh.pop %v168
    %v171 = vld [vmem:[#allocation8] sm:$0xff]
    %v172 = vld [vmem:[#allocation8 + $0x8] sm:$0xff]
    %v173 = vld [vmem:[#allocation8 + $0x10] sm:$0xff]
    %v174 = vld [vmem:[#allocation8 + $0x18] sm:$0xff]
    %v175 = vld [vmem:[#allocation8 + $0x20] sm:$0xff]
    %v176 = vld [vmem:[#allocation8 + $0x28] sm:$0xff]
    %v177 = vld [vmem:[#allocation8 + $0x30] sm:$0xff]
    %v178 = vld [vmem:[#allocation8 + $0x38] sm:$0xff]
    %v179 = vld [vmem:[#allocation8 + $0x40] sm:$0xff]
    %v180 = vld [vmem:[#allocation8 + $0x48] sm:$0xff]
    %v181 = vld [vmem:[#allocation8 + $0x50] sm:$0xff]
    %v182 = vld [vmem:[#allocation8 + $0x58] sm:$0xff]
    %v183 = vld [vmem:[#allocation8 + $0x60] sm:$0xff]
    %v184 = vld [vmem:[#allocation8 + $0x68] sm:$0xff]
    %v185 = vld [vmem:[#allocation8 + $0x70] sm:$0xff]
    %v186 = vld [vmem:[#allocation8 + $0x78] sm:$0xff]
    %v187 = vld [vmem:[%s6] sm:$0x1]
    %v189 = vperm.slane %v187, 0
    %191 = vmatpush.msra.mxu0 %v186
    %192 = vmatpush.msra.mxu0 %v185
    %193 = vmatpush.msra.mxu0 %v184
    %194 = vmatpush.msra.mxu0 %v183
    %195 = vmatpush.msra.mxu0 %v182
    %196 = vmatpush.msra.mxu0 %v181
    %197 = vmatpush.msra.mxu0 %v180
    %198 = vmatpush.msra.mxu0 %v179
    %199 = vmatpush.msra.mxu0 %v178
    %200 = vmatpush.msra.mxu0 %v177
    %201 = vmatpush.msra.mxu0 %v176
    %202 = vmatpush.msra.mxu0 %v175
    %203 = vmatpush.msra.mxu0 %v174
    %204 = vmatpush.msra.mxu0 %v173
    %205 = vmatpush.msra.mxu0 %v172
    %206 = vmatpush.msra.mxu0 %v171
    %207 = vmatmul.f32.gmra.mxu0 %v170
    %v208 = vpop.f32.mrf.mxu0
    %v209 = vadd.f32 %v189, %v208
    %210 = vdwg.mxu0
    %211 = vst [vmem:[#allocation10] sm:$0xff] %v209
    // Predicated region
    $region46: #{tpu_custom_call.1} parent=1 // pred_check
      _
    $region47: #{tpu_custom_call.1} parent=1 // pred_check_branch
      %213 = sbr.rel (0) target = $region49
    $region48: #{tpu_custom_call.1} parent=1 // pred_region
      %215 = vsyncadd [#allocation4], 0
      %s217 = sshll.u32 [#allocation10], 4
      %s218 = int_to_ptr.vmem [resolvable:$true] %s217
      %s219 = sshll.u32 %s7, 4
      %s220 = int_to_ptr.hbm [resolvable:$true] %s219
      %222 = dma.vmem_to_hbm [thread:$0]  %s218, 128, %s220, [#allocation4]
    $region49: #{tpu_custom_call.1} parent=1 // pred_fallthru
      _
    // Predicated region
    $region50: #{tpu_custom_call.1} parent=1 // pred_check
      _
    $region51: #{tpu_custom_call.1} parent=1 // pred_check_branch
      %224 = sbr.rel (0) target = $region53
    $region52: #{tpu_custom_call.1} parent=1 // pred_region
      %226 = dma.done [#allocation4], 128
    $region53: #{tpu_custom_call.1} parent=1 // pred_fallthru
      _
    %227 = vsyncpa [#allocation3], 1
    %228 = vsyncpa [#allocation6], 1
    %229 = vsyncpa [#allocation9], 1
    %230 = vsyncpa [#allocation4], 1

// kernel: tpu_custom_call.1
$region0: #{tpu_custom_call.1}
  #allocation0 [shape = 'u32[]', space=smem, size = 0x4, offset = 0x4, fixed_abs, tag = 'smem constant byte address 0x4 - core index']
  #allocation1 [shape = 'u32[72,128]{1,0:T(1,128)}', space=vmem, size = 0x9000, scoped, tag = 'internal scratch']
  %s0 = inlined_call_operand.hbm [shape: f32[8,128], index: 0, kind: input, shape index: {}]
  %s1 = inlined_call_operand.hbm [shape: f32[128,128], index: 1, kind: input, shape index: {}]
  %s2 = inlined_call_operand.vmem [shape: f32[1,128], index: 2, kind: input, shape index: {}]
  %s3 = inlined_call_operand.hbm [shape: f32[128,128], index: 3, kind: input, shape index: {}]
  %s4 = inlined_call_operand.vmem [shape: f32[1,128], index: 4, kind: input, shape index: {}]
  %s5 = inlined_call_operand.hbm [shape: f32[128,128], index: 5, kind: input, shape index: {}]
  %s6 = inlined_call_operand.vmem [shape: f32[1,128], index: 6, kind: input, shape index: {}]
  %s7 = inlined_call_operand.hbm [shape: f32[8,128], index: 7, kind: output, shape index: {}]
  %s8 = sld [smem:[#allocation0]]
  $region54: #{tpu_custom_call.1} parent=0
    _
  %s10 = ssub.s32 1, %s8
  %s11 = scalar_select 0, %s10, %s8
  $region1: #{tpu_custom_call.1} parent=0
    #allocation2 [shape = 'u8[4096]{0}', space=vmem, size = 0x1000, scoped, tag = 'input window, operand 0, single buffered']
    #allocation3 [shape = 's32[1]{0}', space=sflag, size = 0x4, scoped, tag = 'scoped memory for tpu_custom_call.1']
    #allocation4 [shape = 's32[1]{0}', space=sflag, size = 0x4, scoped, tag = 'scoped memory for tpu_custom_call.1']
    #allocation5 [shape = 'u8[65536]{0}', space=vmem, size = 0x10000, scoped, tag = 'input window, operand 1, single buffered']
    #allocation6 [shape = 's32[1]{0}', space=sflag, size = 0x4, scoped, tag = 'scoped memory for tpu_custom_call.1']
    #allocation7 [shape = 'u8[65536]{0}', space=vmem, size = 0x10000, scoped, tag = 'input window, operand 3, single buffered']
    #allocation8 [shape = 'u8[65536]{0}', space=vmem, size = 0x10000, scoped, tag = 'input window, operand 5, single buffered']
    #allocation9 [shape = 's32[1]{0}', space=sflag, size = 0x4, scoped, tag = 'scoped memory for tpu_custom_call.1']
    #allocation10 [shape = 'u8[4096]{0}', space=vmem, size = 0x1000, scoped, tag = 'output window, operand 0, single buffered']
    %12 = vsyncpa [#allocation3], 0
    %13 = vsyncpa [#allocation6], 0
    %14 = vsyncpa [#allocation9], 0
    %15 = vsyncpa [#allocation4], 0
    // Predicated region
    $region2: #{tpu_custom_call.1} parent=1 // pred_check
      _
    $region3: #{tpu_custom_call.1} parent=1 // pred_check_branch
      %17 = sbr.rel (0) target = $region5
    $region4: #{tpu_custom_call.1} parent=1 // pred_region
      %19 = vsyncadd [#allocation3], 0
      %s21 = sshll.u32 %s0, 4
      %s22 = int_to_ptr.hbm [resolvable:$true] %s21
      %s23 = sshll.u32 [#allocation2], 4
      %s24 = int_to_ptr.vmem [resolvable:$true] %s23
      %26 = dma.hbm_to_vmem [thread:$0]  %s22, 128, %s24, [#allocation3]
    $region5: #{tpu_custom_call.1} parent=1 // pred_fallthru
      _
    // Predicated region
    $region6: #{tpu_custom_call.1} parent=1 // pred_check
      _
    $region7: #{tpu_custom_call.1} parent=1 // pred_check_branch
      %28 = sbr.rel (0) target = $region9
    $region8: #{tpu_custom_call.1} parent=1 // pred_region
      %30 = vsyncadd [#allocation6], 0
      %s31 = sshll.u32 %s1, 4
      %s32 = int_to_ptr.hbm [resolvable:$true] %s31
      %s33 = sshll.u32 [#allocation5], 4
      %s34 = int_to_ptr.vmem [resolvable:$true] %s33
      %39 = dma.hbm_to_vmem [thread:$0]  %s32, 2048, %s34, [#allocation6], 128, 128, 8
    $region9: #{tpu_custom_call.1} parent=1 // pred_fallthru
      _
    // Predicated region
    $region10: #{tpu_custom_call.1} parent=1 // pred_check
      _
    $region11: #{tpu_custom_call.1} parent=1 // pred_check_branch
      %41 = sbr.rel (0) target = $region13
    $region12: #{tpu_custom_call.1} parent=1 // pred_region
      _
    $region13: #{tpu_custom_call.1} parent=1 // pred_fallthru
      _
    // Predicated region
    $region14: #{tpu_custom_call.1} parent=1 // pred_check
      _
    $region15: #{tpu_custom_call.1} parent=1 // pred_check_branch
      %43 = sbr.rel (0) target = $region17
    $region16: #{tpu_custom_call.1} parent=1 // pred_region
      %45 = vsyncadd [#allocation6], 0
      %s46 = sshll.u32 %s3, 4
      %s47 = int_to_ptr.hbm [resolvable:$true] %s46
      %s48 = sshll.u32 [#allocation7], 4
      %s49 = int_to_ptr.vmem [resolvable:$true] %s48
      %54 = dma.hbm_to_vmem [thread:$0]  %s47, 2048, %s49, [#allocation6], 128, 128, 8
    $region17: #{tpu_custom_call.1} parent=1 // pred_fallthru
      _
    // Predicated region
    $region18: #{tpu_custom_call.1} parent=1 // pred_check
      _
    $region19: #{tpu_custom_call.1} parent=1 // pred_check_branch
      %56 = sbr.rel (0) target = $region21
    $region20: #{tpu_custom_call.1} parent=1 // pred_region
      _
    $region21: #{tpu_custom_call.1} parent=1 // pred_fallthru
      _
    // Predicated region
    $region22: #{tpu_custom_call.1} parent=1 // pred_check
      _
    $region23: #{tpu_custom_call.1} parent=1 // pred_check_branch
      %58 = sbr.rel (0) target = $region25
    $region24: #{tpu_custom_call.1} parent=1 // pred_region
      %60 = vsyncadd [#allocation9], 0
      %s61 = sshll.u32 %s5, 4
      %s62 = int_to_ptr.hbm [resolvable:$true] %s61
      %s63 = sshll.u32 [#allocation8], 4
      %s64 = int_to_ptr.vmem [resolvable:$true] %s63
      %69 = dma.hbm_to_vmem [thread:$0]  %s62, 2048, %s64, [#allocation9], 128, 128, 8
    $region25: #{tpu_custom_call.1} parent=1 // pred_fallthru
      _
    // Predicated region
    $region26: #{tpu_custom_call.1} parent=1 // pred_check
      _
    $region27: #{tpu_custom_call.1} parent=1 // pred_check_branch
      %71 = sbr.rel (0) target = $region29
    $region28: #{tpu_custom_call.1} parent=1 // pred_region
      _
    $region29: #{tpu_custom_call.1} parent=1 // pred_fallthru
      _
    // Predicated region
    $region30: #{tpu_custom_call.1} parent=1 // pred_check
      _
    $region31: #{tpu_custom_call.1} parent=1 // pred_check_branch
      %73 = sbr.rel (0) target = $region33
    $region32: #{tpu_custom_call.1} parent=1 // pred_region
      %75 = dma.done [#allocation3], 128
    $region33: #{tpu_custom_call.1} parent=1 // pred_fallthru
      _
    // Predicated region
    $region34: #{tpu_custom_call.1} parent=1 // pred_check
      _
    $region35: #{tpu_custom_call.1} parent=1 // pred_check_branch
      %77 = sbr.rel (0) target = $region37
    $region36: #{tpu_custom_call.1} parent=1 // pred_region
      %79 = dma.done [#allocation6], 2048
    $region37: #{tpu_custom_call.1} parent=1 // pred_fallthru
      _
    // Predicated region
    $region38: #{tpu_custom_call.1} parent=1 // pred_check
      _
    $region39: #{tpu_custom_call.1} parent=1 // pred_check_branch
      %81 = sbr.rel (0) target = $region41
    $region40: #{tpu_custom_call.1} parent=1 // pred_region
      %83 = dma.done [#allocation6], 2048
    $region41: #{tpu_custom_call.1} parent=1 // pred_fallthru
      _
    // Predicated region
    $region42: #{tpu_custom_call.1} parent=1 // pred_check
      _
    $region43: #{tpu_custom_call.1} parent=1 // pred_check_branch
      %85 = sbr.rel (0) target = $region45
    $region44: #{tpu_custom_call.1} parent=1 // pred_region
      %87 = dma.done [#allocation9], 2048
    $region45: #{tpu_custom_call.1} parent=1 // pred_fallthru
      _
    %v88 = vld [vmem:[#allocation2] sm:$0xff]
    %v89 = vld [vmem:[#allocation5] sm:$0xff]
    %v90 = vld [vmem:[#allocation5 + $0x8] sm:$0xff]
    %v91 = vld [vmem:[#allocation5 + $0x10] sm:$0xff]
    %v92 = vld [vmem:[#allocation5 + $0x18] sm:$0xff]
    %v93 = vld [vmem:[#allocation5 + $0x20] sm:$0xff]
    %v94 = vld [vmem:[#allocation5 + $0x28] sm:$0xff]
    %v95 = vld [vmem:[#allocation5 + $0x30] sm:$0xff]
    %v96 = vld [vmem:[#allocation5 + $0x38] sm:$0xff]
    %v97 = vld [vmem:[#allocation5 + $0x40] sm:$0xff]
    %v98 = vld [vmem:[#allocation5 + $0x48] sm:$0xff]
    %v99 = vld [vmem:[#allocation5 + $0x50] sm:$0xff]
    %v100 = vld [vmem:[#allocation5 + $0x58] sm:$0xff]
    %v101 = vld [vmem:[#allocation5 + $0x60] sm:$0xff]
    %v102 = vld [vmem:[#allocation5 + $0x68] sm:$0xff]
    %v103 = vld [vmem:[#allocation5 + $0x70] sm:$0xff]
    %v104 = vld [vmem:[#allocation5 + $0x78] sm:$0xff]
    %v105 = vld [vmem:[%s2] sm:$0x1]
    %v107 = vperm.slane %v105, 0
    %109 = vmatpush.msra.mxu0 %v104
    %110 = vmatpush.msra.mxu0 %v103
    %111 = vmatpush.msra.mxu0 %v102
    %112 = vmatpush.msra.mxu0 %v101
    %113 = vmatpush.msra.mxu0 %v100
    %114 = vmatpush.msra.mxu0 %v99
    %115 = vmatpush.msra.mxu0 %v98
    %116 = vmatpush.msra.mxu0 %v97
    %117 = vmatpush.msra.mxu0 %v96
    %118 = vmatpush.msra.mxu0 %v95
    %119 = vmatpush.msra.mxu0 %v94
    %120 = vmatpush.msra.mxu0 %v93
    %121 = vmatpush.msra.mxu0 %v92
    %122 = vmatpush.msra.mxu0 %v91
    %123 = vmatpush.msra.mxu0 %v90
    %124 = vmatpush.msra.mxu0 %v89
    %125 = vmatmul.f32.gmra.mxu0 %v88
    %v126 = vpop.f32.mrf.mxu0
    %v127 = vadd.f32 %v107, %v126
    %128 = vdwg.mxu0
    %v129 = vtanh.pop %v127
    %v130 = vld [vmem:[#allocation7] sm:$0xff]
    %v131 = vld [vmem:[#allocation7 + $0x8] sm:$0xff]
    %v132 = vld [vmem:[#allocation7 + $0x10] sm:$0xff]
    %v133 = vld [vmem:[#allocation7 + $0x18] sm:$0xff]
    %v134 = vld [vmem:[#allocation7 + $0x20] sm:$0xff]
    %v135 = vld [vmem:[#allocation7 + $0x28] sm:$0xff]
    %v136 = vld [vmem:[#allocation7 + $0x30] sm:$0xff]
    %v137 = vld [vmem:[#allocation7 + $0x38] sm:$0xff]
    %v138 = vld [vmem:[#allocation7 + $0x40] sm:$0xff]
    %v139 = vld [vmem:[#allocation7 + $0x48] sm:$0xff]
    %v140 = vld [vmem:[#allocation7 + $0x50] sm:$0xff]
    %v141 = vld [vmem:[#allocation7 + $0x58] sm:$0xff]
    %v142 = vld [vmem:[#allocation7 + $0x60] sm:$0xff]
    %v143 = vld [vmem:[#allocation7 + $0x68] sm:$0xff]
    %v144 = vld [vmem:[#allocation7 + $0x70] sm:$0xff]
    %v145 = vld [vmem:[#allocation7 + $0x78] sm:$0xff]
    %v146 = vld [vmem:[%s4] sm:$0x1]
    %v148 = vperm.slane %v146, 0
    %150 = vmatpush.msra.mxu0 %v145
    %151 = vmatpush.msra.mxu0 %v144
    %152 = vmatpush.msra.mxu0 %v143
    %153 = vmatpush.msra.mxu0 %v142
    %154 = vmatpush.msra.mxu0 %v141
    %155 = vmatpush.msra.mxu0 %v140
    %156 = vmatpush.msra.mxu0 %v139
    %157 = vmatpush.msra.mxu0 %v138
    %158 = vmatpush.msra.mxu0 %v137
    %159 = vmatpush.msra.mxu0 %v136
    %160 = vmatpush.msra.mxu0 %v135
    %161 = vmatpush.msra.mxu0 %v134
    %162 = vmatpush.msra.mxu0 %v133
    %163 = vmatpush.msra.mxu0 %v132
    %164 = vmatpush.msra.mxu0 %v131
    %165 = vmatpush.msra.mxu0 %v130
    %166 = vmatmul.f32.gmra.mxu0 %v129
    %v167 = vpop.f32.mrf.mxu0
    %v168 = vadd.f32 %v148, %v167
    %169 = vdwg.mxu0
    %v170 = vtanh.pop %v168
    %v171 = vld [vmem:[#allocation8] sm:$0xff]
    %v172 = vld [vmem:[#allocation8 + $0x8] sm:$0xff]
    %v173 = vld [vmem:[#allocation8 + $0x10] sm:$0xff]
    %v174 = vld [vmem:[#allocation8 + $0x18] sm:$0xff]
    %v175 = vld [vmem:[#allocation8 + $0x20] sm:$0xff]
    %v176 = vld [vmem:[#allocation8 + $0x28] sm:$0xff]
    %v177 = vld [vmem:[#allocation8 + $0x30] sm:$0xff]
    %v178 = vld [vmem:[#allocation8 + $0x38] sm:$0xff]
    %v179 = vld [vmem:[#allocation8 + $0x40] sm:$0xff]
    %v180 = vld [vmem:[#allocation8 + $0x48] sm:$0xff]
    %v181 = vld [vmem:[#allocation8 + $0x50] sm:$0xff]
    %v182 = vld [vmem:[#allocation8 + $0x58] sm:$0xff]
    %v183 = vld [vmem:[#allocation8 + $0x60] sm:$0xff]
    %v184 = vld [vmem:[#allocation8 + $0x68] sm:$0xff]
    %v185 = vld [vmem:[#allocation8 + $0x70] sm:$0xff]
    %v186 = vld [vmem:[#allocation8 + $0x78] sm:$0xff]
    %v187 = vld [vmem:[%s6] sm:$0x1]
    %v189 = vperm.slane %v187, 0
    %191 = vmatpush.msra.mxu0 %v186
    %192 = vmatpush.msra.mxu0 %v185
    %193 = vmatpush.msra.mxu0 %v184
    %194 = vmatpush.msra.mxu0 %v183
    %195 = vmatpush.msra.mxu0 %v182
    %196 = vmatpush.msra.mxu0 %v181
    %197 = vmatpush.msra.mxu0 %v180
    %198 = vmatpush.msra.mxu0 %v179
    %199 = vmatpush.msra.mxu0 %v178
    %200 = vmatpush.msra.mxu0 %v177
    %201 = vmatpush.msra.mxu0 %v176
    %202 = vmatpush.msra.mxu0 %v175
    %203 = vmatpush.msra.mxu0 %v174
    %204 = vmatpush.msra.mxu0 %v173
    %205 = vmatpush.msra.mxu0 %v172
    %206 = vmatpush.msra.mxu0 %v171
    %207 = vmatmul.f32.gmra.mxu0 %v170
    %v208 = vpop.f32.mrf.mxu0
    %v209 = vadd.f32 %v189, %v208
    %210 = vdwg.mxu0
    %211 = vst [vmem:[#allocation10] sm:$0xff] %v209
    // Predicated region
    $region46: #{tpu_custom_call.1} parent=1 // pred_check
      _
    $region47: #{tpu_custom_call.1} parent=1 // pred_check_branch
      %213 = sbr.rel (0) target = $region49
    $region48: #{tpu_custom_call.1} parent=1 // pred_region
      %215 = vsyncadd [#allocation4], 0
      %s217 = sshll.u32 [#allocation10], 4
      %s218 = int_to_ptr.vmem [resolvable:$true] %s217
      %s219 = sshll.u32 %s7, 4
      %s220 = int_to_ptr.hbm [resolvable:$true] %s219
      %222 = dma.vmem_to_hbm [thread:$0]  %s218, 128, %s220, [#allocation4]
    $region49: #{tpu_custom_call.1} parent=1 // pred_fallthru
      _
    // Predicated region
    $region50: #{tpu_custom_call.1} parent=1 // pred_check
      _
    $region51: #{tpu_custom_call.1} parent=1 // pred_check_branch
      %224 = sbr.rel (0) target = $region53
    $region52: #{tpu_custom_call.1} parent=1 // pred_region
      %226 = dma.done [#allocation4], 128
    $region53: #{tpu_custom_call.1} parent=1 // pred_fallthru
      _
    %227 = vsyncpa [#allocation3], 1
    %228 = vsyncpa [#allocation6], 1
    %229 = vsyncpa [#allocation9], 1
    %230 = vsyncpa [#allocation4], 1

</llo_original>
